<compile_context>
chip_gen: v6e
topology: v6e:2x2x1
jax: 0.10.0
libtpu: 0.0.40
codegen_flags: <defaults>
</compile_context>

<pallas_src>
import jax
import jax.numpy as jnp
from jax.experimental import pallas as pl
from jax.experimental.pallas import tpu as pltpu

LANE = 128
SUBLANE = 8


def _round_up(x, m):
    return (x + m - 1) // m * m


# ----------------------------------------------------------------------------
# Pallas kernels
# ----------------------------------------------------------------------------
def _proto_matmul_kernel(x_ref, w_ref, o_ref):
    # logits = x @ W^T ; w_ref already holds W^T (output_dim, P_pad)
    o_ref[...] = jnp.dot(
        x_ref[...], w_ref[...], preferred_element_type=jnp.float32
    ).astype(o_ref.dtype)


def _normalize_cols_kernel(w_ref, o_ref):
    # Columns of w_ref are the prototypes (w_ref = W^T), so normalizing each
    # prototype (F.normalize(W, dim=1)) == normalizing each column of W^T.
    w = w_ref[...].astype(jnp.float32)
    norm = jnp.sqrt(jnp.sum(w * w, axis=0, keepdims=True))
    o_ref[...] = (w / jnp.maximum(norm, 1e-12)).astype(o_ref.dtype)


# ----------------------------------------------------------------------------
# Wrappers
# ----------------------------------------------------------------------------
def prototypes_forward(x, w_t_padded, num_prototypes):
    """Prototypes.forward: x (M, D) @ W^T (D, P_pad) -> logits (M, P)."""
    M, D = x.shape
    Dp, Pp = w_t_padded.shape
    assert D == Dp and Pp % LANE == 0

    TM = min(256, _round_up(M, SUBLANE))
    Mp = _round_up(M, TM)
    xp = x if Mp == M else jnp.pad(x, ((0, Mp - M), (0, 0)))

    out = pl.pallas_call(
        _proto_matmul_kernel,
        out_shape=jax.ShapeDtypeStruct((Mp, Pp), x.dtype),
        grid=(Mp // TM,),
        in_specs=[
            pl.BlockSpec((TM, D), lambda i: (i, 0)),       # row tile of x
            pl.BlockSpec((D, Pp), lambda i: (0, 0)),       # whole W^T, VMEM-resident
        ],
        out_specs=pl.BlockSpec((TM, Pp), lambda i: (i, 0)),
        compiler_params=pltpu.CompilerParams(
            dimension_semantics=("parallel",)),
    )(xp, w_t_padded)

    return out[:M, :num_prototypes]


def normalize_prototypes(w_t_padded):
    """Prototypes.normalize_prototypes on the transposed, padded weight."""
    return pl.pallas_call(
        _normalize_cols_kernel,
        out_shape=jax.ShapeDtypeStruct(w_t_padded.shape, w_t_padded.dtype),
    )(w_t_padded)


def init_prototypes(key, output_dim, num_prototypes):
    """nn.Linear(output_dim, num_prototypes, bias=False) default init,
    stored transposed (output_dim, P_pad) with lane-dense zero padding."""
    bound = 1.0 / (output_dim ** 0.5)
    w = jax.random.uniform(
        key, (num_prototypes, output_dim), jnp.float32, -bound, bound)
    p_pad = _round_up(num_prototypes, LANE)
    w_t = jnp.zeros((output_dim, p_pad), jnp.float32)
    w_t = w_t.at[:, :num_prototypes].set(w.T)
    return w_t


# ----------------------------------------------------------------------------
if __name__ == "__main__":
    key = jax.random.PRNGKey(0)
    kx, kw = jax.random.split(key)

    # small shapes implied by the module: x (batch, output_dim)
    batch, output_dim, num_prototypes = 16, 32, 10

    w_raw_t = init_prototypes(kw, output_dim, num_prototypes)   # (D, P_pad)
    x = jax.random.normal(kx, (batch, output_dim), jnp.float32)

    # normalize_prototypes() then forward(x), both as Pallas kernels
    w_t = normalize_prototypes(w_raw_t)
    logits = prototypes_forward(x, w_t, num_prototypes)
    jax.block_until_ready(logits)

    assert logits.shape == (batch, num_prototypes)

    # numerics check against a plain-JAX reference of the PyTorch semantics
    w_raw = w_raw_t[:, :num_prototypes].T                        # (P, D)
    w_norm = w_raw / jnp.maximum(
        jnp.linalg.norm(w_raw, axis=1, keepdims=True), 1e-12)
    ref = x @ w_norm.T
    assert bool(jnp.allclose(logits, ref, atol=1e-5, rtol=1e-5))

    print("KERNEL_OK")
</pallas_src>

<mosaic_0001>
module attributes {stable_mosaic.version = 11 : i64} {
  func.func @_normalize_cols_kernel(%arg0: memref<32x128xf32, #tpu.memory_space<vmem>>, %arg1: memref<32x128xf32, #tpu.memory_space<vmem>>) attributes {dimension_semantics = [], scalar_prefetch = 0 : i64, scratch_operands = 0 : i64, tpu.core_type = #tpu.core_type<tc>} {
    %c0 = arith.constant 0 : index
    %c0_0 = arith.constant 0 : index
    %0 = vector.load %arg0[%c0, %c0_0] : memref<32x128xf32, #tpu.memory_space<vmem>>, vector<32x128xf32>
    %1 = arith.mulf %0, %0 : vector<32x128xf32>
    %cst = arith.constant dense<0.000000e+00> : vector<128xf32>
    %2 = vector.multi_reduction <add>, %1, %cst [0] : vector<32x128xf32> to vector<128xf32>
    %3 = vector.shape_cast %2 : vector<128xf32> to vector<1x128xf32>
    %4 = math.sqrt %3 : vector<1x128xf32>
    %cst_1 = arith.constant 9.99999996E-13 : f32
    %5 = vector.broadcast %cst_1 : f32 to vector<1x128xf32>
    %6 = arith.maximumf %4, %5 : vector<1x128xf32>
    %7 = vector.broadcast %6 : vector<1x128xf32> to vector<32x128xf32>
    %8 = arith.divf %0, %7 : vector<32x128xf32>
    %c0_2 = arith.constant 0 : index
    %c0_3 = arith.constant 0 : index
    %9 = vector.load %arg1[%c0_2, %c0_3] : memref<32x128xf32, #tpu.memory_space<vmem>>, vector<32x128xf32>
    tpu.vector_store %arg1[%c0_2, %c0_3], %8 {strides = array<i32>} : memref<32x128xf32, #tpu.memory_space<vmem>>, vector<32x128xf32>,
    return
  }
}

</mosaic_0001>

<llo_original>
// kernel: tpu_custom_call.1
$region0: #{tpu_custom_call.1}
  #allocation0 [shape = 'u32[]', space=smem, size = 0x4, offset = 0x4, fixed_abs, tag = 'smem constant byte address 0x4 - core index']
  #allocation1 [shape = 'u32[144,128]{1,0:T(1,128)}', space=vmem, size = 0x12000, scoped, tag = 'internal scratch']
  %s0 = inlined_call_operand.hbm [shape: f32[32,128], index: 0, kind: input, shape index: {}]
  %s1 = inlined_call_operand.hbm [shape: f32[32,128], index: 1, kind: output, shape index: {}]
  %s2 = sld [smem:[#allocation0]]
  $region18: #{tpu_custom_call.1} parent=0
    _
  %s4 = ssub.s32 1, %s2
  %s5 = scalar_select 0, %s4, %s2
  $region1: #{tpu_custom_call.1} parent=0
    #allocation2 [shape = 'u8[16384]{0}', space=vmem, size = 0x4000, scoped, tag = 'input window, operand 0, single buffered']
    #allocation3 [shape = 's32[1]{0}', space=sflag, size = 0x4, scoped, tag = 'scoped memory for tpu_custom_call.1']
    #allocation4 [shape = 's32[1]{0}', space=sflag, size = 0x4, scoped, tag = 'scoped memory for tpu_custom_call.1']
    #allocation5 [shape = 'u8[16384]{0}', space=vmem, size = 0x4000, scoped, tag = 'output window, operand 0, single buffered']
    %6 = vsyncpa [#allocation3], 0
    %7 = vsyncpa [#allocation4], 0
    // Predicated region
    $region2: #{tpu_custom_call.1} parent=1 // pred_check
      _
    $region3: #{tpu_custom_call.1} parent=1 // pred_check_branch
      %9 = sbr.rel (0) target = $region5
    $region4: #{tpu_custom_call.1} parent=1 // pred_region
      %s11 = ssub.s32 512, 512
      %12 = vsyncadd [#allocation3], %s11
      %s13 = sshll.u32 [#allocation2], 4
      %s14 = int_to_ptr.vmem [resolvable:$true] %s13
      %19 = dma.hbm_to_vmem [thread:$0]  %s0, 512, %s14, [#allocation3], 128, 128, 8
    $region5: #{tpu_custom_call.1} parent=1 // pred_fallthru
      _
    // Predicated region
    $region6: #{tpu_custom_call.1} parent=1 // pred_check
      _
    $region7: #{tpu_custom_call.1} parent=1 // pred_check_branch
      %21 = sbr.rel (0) target = $region9
    $region8: #{tpu_custom_call.1} parent=1 // pred_region
      %22 = dma.done [#allocation3], 512
    $region9: #{tpu_custom_call.1} parent=1 // pred_fallthru
      _
    %v23 = vld [vmem:[#allocation2] sm:$0xff]
    %v24 = vld [vmem:[#allocation2 + $0x8] sm:$0xff]
    %v25 = vld [vmem:[#allocation2 + $0x10] sm:$0xff]
    %v26 = vld [vmem:[#allocation2 + $0x18] sm:$0xff]
    %v27 = vmul.f32 %v23, %v23
    %v28 = vmul.f32 %v24, %v24
    %v29 = vmul.f32 %v25, %v25
    %v30 = vmul.f32 %v26, %v26
    %v31 = vadd.f32 %v27, %v28
    %v32 = vadd.f32 %v31, %v29
    %v33 = vadd.f32 %v32, %v30
    %v34 = vrot.slane %v33, 4
    %v35 = vadd.f32 %v33, %v34
    %v36 = vrot.slane %v35, 2
    %v37 = vadd.f32 %v35, %v36
    %v38 = vrot.slane %v37, 1
    %v39 = vadd.f32 %v37, %v38
    %v40 = vrsqrt.pop %v39
    %v41 = vmul.f32 %v39, %v40
    %vm42 = vcmp.eq.f32.partialorder %v39, inf
    %v43 = vsel %vm42, %v39, %v41
    %vm44 = vcmp.eq.f32.partialorder %v39, 0.0
    %v45 = vand.u32 %v39, 2147483648
    %v46 = vsel %vm44, %v45, %v43
    %v47 = vmax.f32 %v46, 1e-12
    %v48 = vrcp.pop %v47
    %v49 = vmul.f32 %v23, %v48
    %v50 = vmul.f32 %v24, %v48
    %v51 = vmul.f32 %v25, %v48
    %v52 = vmul.f32 %v26, %v48
    %53 = vst [vmem:[#allocation5] sm:$0xff] %v49
    %54 = vst [vmem:[#allocation5 + $0x8] sm:$0xff] %v50
    %55 = vst [vmem:[#allocation5 + $0x10] sm:$0xff] %v51
    %56 = vst [vmem:[#allocation5 + $0x18] sm:$0xff] %v52
    // Predicated region
    $region10: #{tpu_custom_call.1} parent=1 // pred_check
      _
    $region11: #{tpu_custom_call.1} parent=1 // pred_check_branch
      %58 = sbr.rel (0) target = $region13
    $region12: #{tpu_custom_call.1} parent=1 // pred_region
      %s60 = ssub.s32 512, 512
      %61 = vsyncadd [#allocation4], %s60
      %s62 = sshll.u32 [#allocation5], 4
      %s63 = int_to_ptr.vmem [resolvable:$true] %s62
      %68 = dma.vmem_to_hbm [thread:$0]  %s63, 512, %s1, [#allocation4], 128, 128, 8
    $region13: #{tpu_custom_call.1} parent=1 // pred_fallthru
      _
    // Predicated region
    $region14: #{tpu_custom_call.1} parent=1 // pred_check
      _
    $region15: #{tpu_custom_call.1} parent=1 // pred_check_branch
      %70 = sbr.rel (0) target = $region17
    $region16: #{tpu_custom_call.1} parent=1 // pred_region
      %71 = dma.done [#allocation4], 512
    $region17: #{tpu_custom_call.1} parent=1 // pred_fallthru
      _
    %72 = vsyncpa [#allocation3], 1
    %73 = vsyncpa [#allocation4], 1

</llo_original>
